<compile_context>
chip_gen: v7x
topology: tpu7x:2x2x1
jax: 0.10.0
libtpu: 0.0.40
codegen_flags: <defaults>
</compile_context>

<pallas_src>
import jax
import jax.numpy as jnp
from jax import lax
from jax.experimental import pallas as pl
from jax.experimental.pallas import tpu as pltpu


def _fc_self_attn_kernel(k_ref, q_ref, v_ref, wout_ref, bout_ref, o_ref,
                         acc_scratch, m_scratch, l_scratch):
    """Grid step (b, i, j): output-row tile i (K side), softmax-axis tile j (Q/V)."""
    j = pl.program_id(2)

    @pl.when(j == 0)
    def _init():
        m_scratch[...] = jnp.full(m_scratch.shape, -jnp.inf, m_scratch.dtype)
        l_scratch[...] = jnp.zeros(l_scratch.shape, l_scratch.dtype)
        acc_scratch[...] = jnp.zeros(acc_scratch.shape, acc_scratch.dtype)

    k = k_ref[0]          # (H, TN, D) bf16 -- output-row side
    q = q_ref[0]          # (H, TM, D) bf16 -- softmax axis (scale pre-folded)
    v = v_ref[0]          # (H, TM, D) bf16

    # scores[h, n, m] = sum_d k[h,n,d] * q[h,m,d]   (head is a batch dim)
    s = lax.dot_general(k, q, (((2,), (2,)), ((0,), (0,))),
                        preferred_element_type=jnp.float32)        # (H, TN, TM) f32

    m_prev = m_scratch[...]                                         # (H, TN, 1)
    m_new = jnp.maximum(m_prev, jnp.max(s, axis=-1, keepdims=True))
    alpha = jnp.exp(m_prev - m_new)
    p = jnp.exp(s - m_new)                                          # unnormalized probs
    l_scratch[...] = alpha * l_scratch[...] + jnp.sum(p, axis=-1, keepdims=True)
    m_scratch[...] = m_new

    # pv[h, n, d] = sum_m p[h,n,m] * v[h,m,d]
    pv = lax.dot_general(p.astype(jnp.bfloat16), v, (((2,), (1,)), ((0,), (0,))),
                         preferred_element_type=jnp.float32)        # (H, TN, D) f32
    acc_scratch[...] = alpha * acc_scratch[...] + pv

    @pl.when(j == pl.num_programs(2) - 1)
    def _finalize():
        # Deferred softmax normalization: single lane-dense multiply.
        inv_l = pl.reciprocal(l_scratch[...], approx=True)          # (H, TN, 1)
        out_h = (acc_scratch[...] * inv_l).astype(jnp.bfloat16)     # (H, TN, D)
        # Fused output projection, head-major:  y[n,c] = sum_h sum_d out_h[h,n,d]*Wout[h,d,c]
        yh = lax.dot_general(out_h, wout_ref[...], (((2,), (1,)), ((0,), (0,))),
                             preferred_element_type=jnp.float32)    # (H, TN, dim)
        y = jnp.sum(yh, axis=0) + bout_ref[...]                     # (TN, dim)
        o_ref[0] = y.astype(o_ref.dtype)


def _pick_tile(n, cap):
    """Largest tile <= cap that divides n and is a multiple of 16 (bf16 sublane
    packing); falls back to the full extent for awkward n."""
    start = min(cap, n)
    start -= start % 16
    for t in range(start, 0, -16):
        if n % t == 0:
            return t
    return n


def _round_up(x, m):
    return -(-x // m) * m


def _const_block_spec(shape, index_map):
    """Spec for a grid-invariant operand; single-buffered when supported."""
    try:
        return pl.BlockSpec(shape, index_map, pipeline_mode=pl.Buffered(1))
    except (TypeError, ValueError):
        return pl.BlockSpec(shape, index_map)


def fc_self_attention(x, w_qkv, w_out, b_out, *, n_heads, dim_head,
                      tile_n=256, tile_m=256):
    """x: (B, N, dim); w_qkv: (3*inner, dim); w_out: (dim, inner); b_out: (dim,)."""
    x = jnp.asarray(x)
    B, N, dim = x.shape
    inner = n_heads * dim_head
    scale = dim_head ** (-0.5)

    tn = _pick_tile(N, tile_n)
    tm = _pick_tile(N, tile_m)
    # v7x has 2 TensorCores: keep the parallel axes (b, i) at >= 2 tiles of work.
    while B * (N // tn) < 2 and tn % 32 == 0:
        tn //= 2
    grid = (B, N // tn, N // tm)

    # ---- QKV projection done ONCE outside the kernel (plain XLA matmul). ----
    # `scale` folded into Wq; bf16 MXU operands with f32 accumulation.
    wq, wk, wv = jnp.split(jnp.asarray(w_qkv, jnp.float32), 3, axis=0)  # (inner, dim)
    x_bf = x.astype(jnp.bfloat16)

    def project(w):                          # -> (B, n_heads, N, dim_head) bf16
        y = lax.dot_general(x_bf, w.T.astype(jnp.bfloat16),
                            (((2,), (0,)), ((), ())),
                            preferred_element_type=jnp.float32)
        y = y.astype(jnp.bfloat16).reshape(B, N, n_heads, dim_head)
        return y.transpose(0, 2, 1, 3)

    q_h = project(wq * scale)
    k_h = project(wk)
    v_h = project(wv)

    # Head-major output projection weights: (n_heads, dim_head, dim).
    wout_hm = jnp.asarray(w_out, jnp.float32).T.reshape(
        n_heads, dim_head, dim).astype(jnp.bfloat16)
    bout = jnp.asarray(b_out, jnp.float32).reshape(1, dim)

    # ---- VMEM budget (generation-aware), accounting for lane/sublane padding. ----
    out_itemsize = jnp.dtype(x.dtype).itemsize
    lane_d = _round_up(dim_head, 128)
    lane_dim = _round_up(dim, 128)
    est = (
        2 * n_heads * _round_up(tn, 16) * lane_d * 2          # K block (x2 buffers)
        + 4 * n_heads * _round_up(tm, 16) * lane_d * 2        # Q, V blocks (x2 each)
        + 2 * _round_up(tn, 8) * lane_dim * out_itemsize      # output block (x2)
        + n_heads * _round_up(dim_head, 8) * lane_dim * 2     # Wout (single buffer)
        + 8 * lane_dim * 4                                    # bias
        + n_heads * _round_up(tn, 8) * lane_d * 4             # acc scratch
        + 2 * n_heads * _round_up(tn, 8) * 128 * 4            # m / l scratch (lane-padded)
        + 3 * n_heads * _round_up(tn, 8) * _round_up(tm, 128) * 4   # live score values
    )
    try:
        vmem_cap = int(pltpu.get_tpu_info().vmem_capacity_bytes)
    except Exception:  # conservative fallback = v7x per-core VMEM
        vmem_cap = 64 * 1024 * 1024
    vmem_budget = max(int(0.85 * vmem_cap), 16 * 1024 * 1024)
    vmem_limit = int(min(max(2 * est, 16 * 1024 * 1024), vmem_budget))

    n_i = N // tn
    cost = pl.CostEstimate(
        flops=int(4 * B * N * N * inner + 2 * B * N * inner * dim),
        transcendentals=int(B * n_heads * N * N),
        bytes_accessed=int(B * N * inner * 2 * (1 + 2 * n_i)
                           + B * N * dim * out_itemsize
                           + inner * dim * 2 + dim * 4),
    )

    return pl.pallas_call(
        _fc_self_attn_kernel,
        out_shape=jax.ShapeDtypeStruct((B, N, dim), x.dtype),
        grid_spec=pltpu.PrefetchScalarGridSpec(
            num_scalar_prefetch=0,
            grid=grid,
            in_specs=[
                pl.BlockSpec((1, n_heads, tn, dim_head),
                             lambda b, i, j: (b, 0, i, 0)),                    # K rows
                pl.BlockSpec((1, n_heads, tm, dim_head),
                             lambda b, i, j: (b, 0, j, 0)),                    # Q (scaled)
                pl.BlockSpec((1, n_heads, tm, dim_head),
                             lambda b, i, j: (b, 0, j, 0)),                    # V
                _const_block_spec((n_heads, dim_head, dim),
                                  lambda b, i, j: (0, 0, 0)),                  # Wout
                _const_block_spec((1, dim), lambda b, i, j: (0, 0)),           # b_out
            ],
            out_specs=pl.BlockSpec((1, tn, dim), lambda b, i, j: (b, i, 0)),
            scratch_shapes=[
                pltpu.VMEM((n_heads, tn, dim_head), jnp.float32),  # per-head output acc
                pltpu.VMEM((n_heads, tn, 1), jnp.float32),         # running max
                pltpu.VMEM((n_heads, tn, 1), jnp.float32),         # running sum
            ],
        ),
        compiler_params=pltpu.CompilerParams(
            dimension_semantics=("parallel", "parallel", "arbitrary"),
            vmem_limit_bytes=vmem_limit,
        ),
        cost_estimate=cost,
    )(k_h, q_h, v_h, wout_hm, bout)


def _reference(x, w_qkv, w_out, b_out, *, n_heads, dim_head):
    """Pure-JAX f32 transcription of the PyTorch forward (mask=None)."""
    B, N, dim = x.shape
    inner = n_heads * dim_head
    qkv = x @ w_qkv.T
    q, k, v = jnp.split(qkv, 3, axis=-1)
    to_heads = lambda t: t.reshape(B, N, n_heads, dim_head).transpose(0, 2, 1, 3)
    q, k, v = map(to_heads, (q, k, v))
    att = jnp.einsum('bhnd,bhmd->bhnm', k, q) * (dim_head ** (-0.5))
    att = jax.nn.softmax(att, axis=-1)
    out = jnp.einsum('bhne,bhed->bhdn', att, v)            # (b, h, d, n)
    out = out.transpose(0, 3, 1, 2).reshape(B, N, inner)   # 'b h d n -> b n (h d)'
    return out @ w_out.T + b_out


if __name__ == "__main__":
    B, N, DIM = 2, 8, 32
    N_HEADS, DIM_HEAD = 4, 8
    INNER = N_HEADS * DIM_HEAD

    key = jax.random.PRNGKey(0)
    kx, kq, kw, kb, kx2 = jax.random.split(key, 5)

    x = jax.random.normal(kx, (B, N, DIM), dtype=jnp.float32)
    w_qkv = 0.1 * jax.random.normal(kq, (3 * INNER, DIM), dtype=jnp.float32)
    w_out = 0.1 * jax.random.normal(kw, (DIM, INNER), dtype=jnp.float32)
    b_out = 0.1 * jax.random.normal(kb, (DIM,), dtype=jnp.float32)

    # Small shape (single tile on both token axes).
    y = fc_self_attention(x, w_qkv, w_out, b_out,
                          n_heads=N_HEADS, dim_head=DIM_HEAD)
    y = jax.block_until_ready(y)
    y_ref = _reference(x, w_qkv, w_out, b_out,
                       n_heads=N_HEADS, dim_head=DIM_HEAD)
    assert y.shape == (B, N, DIM)
    assert jnp.allclose(y, y_ref, atol=3e-2, rtol=3e-2), "mismatch vs reference"

    # Larger token count with 128-tiles to exercise the multi-tile online-softmax path.
    N2 = 256
    x2 = jax.random.normal(kx2, (B, N2, DIM), dtype=jnp.float32)
    y2 = fc_self_attention(x2, w_qkv, w_out, b_out,
                           n_heads=N_HEADS, dim_head=DIM_HEAD,
                           tile_n=128, tile_m=128)
    y2 = jax.block_until_ready(y2)
    y2_ref = _reference(x2, w_qkv, w_out, b_out,
                        n_heads=N_HEADS, dim_head=DIM_HEAD)
    assert y2.shape == (B, N2, DIM)
    assert jnp.allclose(y2, y2_ref, atol=3e-2, rtol=3e-2), "mismatch vs reference (tiled)"

    print("KERNEL_OK")
</pallas_src>

<mosaic_0001>
module attributes {stable_mosaic.version = 11 : i64} {
  func.func @_fc_self_attn_kernel(%arg0: i32, %arg1: i32, %arg2: i32, %arg3: memref<1x4x8x8xbf16, #tpu.memory_space<vmem>>, %arg4: memref<1x4x8x8xbf16, #tpu.memory_space<vmem>>, %arg5: memref<1x4x8x8xbf16, #tpu.memory_space<vmem>>, %arg6: memref<4x8x32xbf16, #tpu.memory_space<vmem>>, %arg7: memref<1x32xf32, #tpu.memory_space<vmem>>, %arg8: memref<1x8x32xf32, #tpu.memory_space<vmem>>, %arg9: memref<4x8x8xf32, #tpu.memory_space<vmem>>, %arg10: memref<4x8x1xf32, #tpu.memory_space<vmem>>, %arg11: memref<4x8x1xf32, #tpu.memory_space<vmem>>) attributes {dimension_semantics = [#tpu.dimension_semantics<parallel>, #tpu.dimension_semantics<parallel>, #tpu.dimension_semantics<arbitrary>], iteration_bounds = array<i64: 2, 1, 1>, scalar_prefetch = 0 : i64, scratch_operands = 3 : i64, tpu.core_type = #tpu.core_type<tc>, window_params = [{transform_indices = @transform_0, window_bounds = array<i64: 1, 4, 8, 8>}, {transform_indices = @transform_1, window_bounds = array<i64: 1, 4, 8, 8>}, {transform_indices = @transform_2, window_bounds = array<i64: 1, 4, 8, 8>}, {pipeline_mode = #tpu.pipeline_mode<synchronous>, transform_indices = @transform_3, window_bounds = array<i64: 4, 8, 32>}, {pipeline_mode = #tpu.pipeline_mode<synchronous>, transform_indices = @transform_4, window_bounds = array<i64: 1, 32>}, {transform_indices = @transform_5, window_bounds = array<i64: 1, 8, 32>}]} {
    %c0_i32 = arith.constant 0 : i32
    %0 = arith.cmpi eq, %arg2, %c0_i32 : i32
    %1 = arith.extui %0 : i1 to i32
    %c0_i32_0 = arith.constant 0 : i32
    %2 = arith.cmpi ne, %1, %c0_i32_0 : i32
    scf.if %2 {
      %cst_35 = arith.constant 0xFF800000 : f32
      %36 = vector.broadcast %cst_35 : f32 to vector<4x8x1xf32>
      %c0_36 = arith.constant 0 : index
      %c0_37 = arith.constant 0 : index
      %c0_38 = arith.constant 0 : index
      %37 = vector.load %arg10[%c0_36, %c0_37, %c0_38] : memref<4x8x1xf32, #tpu.memory_space<vmem>>, vector<4x8x1xf32>
      tpu.vector_store %arg10[%c0_36, %c0_37, %c0_38], %36 {strides = array<i32>} : memref<4x8x1xf32, #tpu.memory_space<vmem>>, vector<4x8x1xf32>,
      %cst_39 = arith.constant 0.000000e+00 : f32
      %38 = vector.broadcast %cst_39 : f32 to vector<4x8x1xf32>
      %c0_40 = arith.constant 0 : index
      %c0_41 = arith.constant 0 : index
      %c0_42 = arith.constant 0 : index
      %39 = vector.load %arg11[%c0_40, %c0_41, %c0_42] : memref<4x8x1xf32, #tpu.memory_space<vmem>>, vector<4x8x1xf32>
      tpu.vector_store %arg11[%c0_40, %c0_41, %c0_42], %38 {strides = array<i32>} : memref<4x8x1xf32, #tpu.memory_space<vmem>>, vector<4x8x1xf32>,
      %cst_43 = arith.constant 0.000000e+00 : f32
      %40 = vector.broadcast %cst_43 : f32 to vector<4x8x8xf32>
      %c0_44 = arith.constant 0 : index
      %c0_45 = arith.constant 0 : index
      %c0_46 = arith.constant 0 : index
      %41 = vector.load %arg9[%c0_44, %c0_45, %c0_46] : memref<4x8x8xf32, #tpu.memory_space<vmem>>, vector<4x8x8xf32>
      tpu.vector_store %arg9[%c0_44, %c0_45, %c0_46], %40 {strides = array<i32>} : memref<4x8x8xf32, #tpu.memory_space<vmem>>, vector<4x8x8xf32>,
    } else {
    }
    %c0 = arith.constant 0 : index
    %c0_1 = arith.constant 0 : index
    %c0_2 = arith.constant 0 : index
    %c0_3 = arith.constant 0 : index
    %3 = vector.load %arg3[%c0, %c0_1, %c0_2, %c0_3] : memref<1x4x8x8xbf16, #tpu.memory_space<vmem>>, vector<1x4x8x8xbf16>
    %4 = vector.shape_cast %3 : vector<1x4x8x8xbf16> to vector<4x8x8xbf16>
    %c0_4 = arith.constant 0 : index
    %c0_5 = arith.constant 0 : index
    %c0_6 = arith.constant 0 : index
    %c0_7 = arith.constant 0 : index
    %5 = vector.load %arg4[%c0_4, %c0_5, %c0_6, %c0_7] : memref<1x4x8x8xbf16, #tpu.memory_space<vmem>>, vector<1x4x8x8xbf16>
    %6 = vector.shape_cast %5 : vector<1x4x8x8xbf16> to vector<4x8x8xbf16>
    %c0_8 = arith.constant 0 : index
    %c0_9 = arith.constant 0 : index
    %c0_10 = arith.constant 0 : index
    %c0_11 = arith.constant 0 : index
    %7 = vector.load %arg5[%c0_8, %c0_9, %c0_10, %c0_11] : memref<1x4x8x8xbf16, #tpu.memory_space<vmem>>, vector<1x4x8x8xbf16>
    %8 = vector.shape_cast %7 : vector<1x4x8x8xbf16> to vector<4x8x8xbf16>
    %cst = arith.constant dense<0.000000e+00> : vector<4x8x8xf32>
    %9 = tpu.matmul %4, %6, %cst {dimension_numbers = #tpu.dot_dimension_numbers<[2], [2], [1], [1], [0, 0, 0, 1, 1, 1], [0], [0]>} : vector<4x8x8xbf16>, vector<4x8x8xbf16>, vector<4x8x8xf32> -> vector<4x8x8xf32>
    %c0_12 = arith.constant 0 : index
    %c0_13 = arith.constant 0 : index
    %c0_14 = arith.constant 0 : index
    %10 = vector.load %arg10[%c0_12, %c0_13, %c0_14] : memref<4x8x1xf32, #tpu.memory_space<vmem>>, vector<4x8x1xf32>
    %cst_15 = arith.constant dense<0xFF800000> : vector<4x8xf32>
    %11 = vector.multi_reduction <maximumf>, %9, %cst_15 [2] : vector<4x8x8xf32> to vector<4x8xf32>
    %12 = vector.shape_cast %11 : vector<4x8xf32> to vector<4x8x1xf32>
    %13 = arith.maximumf %10, %12 : vector<4x8x1xf32>
    %14 = arith.subf %10, %13 : vector<4x8x1xf32>
    %15 = math.exp %14 : vector<4x8x1xf32>
    %16 = vector.broadcast %13 : vector<4x8x1xf32> to vector<4x8x8xf32>
    %17 = arith.subf %9, %16 : vector<4x8x8xf32>
    %18 = math.exp %17 : vector<4x8x8xf32>
    %c0_16 = arith.constant 0 : index
    %c0_17 = arith.constant 0 : index
    %c0_18 = arith.constant 0 : index
    %19 = vector.load %arg11[%c0_16, %c0_17, %c0_18] : memref<4x8x1xf32, #tpu.memory_space<vmem>>, vector<4x8x1xf32>
    %20 = arith.mulf %15, %19 : vector<4x8x1xf32>
    %cst_19 = arith.constant dense<0.000000e+00> : vector<4x8xf32>
    %21 = vector.multi_reduction <add>, %18, %cst_19 [2] : vector<4x8x8xf32> to vector<4x8xf32>
    %22 = vector.shape_cast %21 : vector<4x8xf32> to vector<4x8x1xf32>
    %23 = arith.addf %20, %22 : vector<4x8x1xf32>
    %c0_20 = arith.constant 0 : index
    %c0_21 = arith.constant 0 : index
    %c0_22 = arith.constant 0 : index
    %24 = vector.load %arg11[%c0_20, %c0_21, %c0_22] : memref<4x8x1xf32, #tpu.memory_space<vmem>>, vector<4x8x1xf32>
    tpu.vector_store %arg11[%c0_20, %c0_21, %c0_22], %23 {strides = array<i32>} : memref<4x8x1xf32, #tpu.memory_space<vmem>>, vector<4x8x1xf32>,
    %c0_23 = arith.constant 0 : index
    %c0_24 = arith.constant 0 : index
    %c0_25 = arith.constant 0 : index
    %25 = vector.load %arg10[%c0_23, %c0_24, %c0_25] : memref<4x8x1xf32, #tpu.memory_space<vmem>>, vector<4x8x1xf32>
    tpu.vector_store %arg10[%c0_23, %c0_24, %c0_25], %13 {strides = array<i32>} : memref<4x8x1xf32, #tpu.memory_space<vmem>>, vector<4x8x1xf32>,
    %26 = arith.truncf %18 : vector<4x8x8xf32> to vector<4x8x8xbf16>
    %cst_26 = arith.constant dense<0.000000e+00> : vector<4x8x8xf32>
    %27 = tpu.matmul %26, %8, %cst_26 {dimension_numbers = #tpu.dot_dimension_numbers<[2], [1], [1], [2], [0, 0, 0, 1, 1, 2], [0], [0]>} : vector<4x8x8xbf16>, vector<4x8x8xbf16>, vector<4x8x8xf32> -> vector<4x8x8xf32>
    %c0_27 = arith.constant 0 : index
    %c0_28 = arith.constant 0 : index
    %c0_29 = arith.constant 0 : index
    %28 = vector.load %arg9[%c0_27, %c0_28, %c0_29] : memref<4x8x8xf32, #tpu.memory_space<vmem>>, vector<4x8x8xf32>
    %29 = vector.broadcast %15 : vector<4x8x1xf32> to vector<4x8x8xf32>
    %30 = arith.mulf %29, %28 : vector<4x8x8xf32>
    %31 = arith.addf %30, %27 : vector<4x8x8xf32>
    %c0_30 = arith.constant 0 : index
    %c0_31 = arith.constant 0 : index
    %c0_32 = arith.constant 0 : index
    %32 = vector.load %arg9[%c0_30, %c0_31, %c0_32] : memref<4x8x8xf32, #tpu.memory_space<vmem>>, vector<4x8x8xf32>
    tpu.vector_store %arg9[%c0_30, %c0_31, %c0_32], %31 {strides = array<i32>} : memref<4x8x8xf32, #tpu.memory_space<vmem>>, vector<4x8x8xf32>,
    %c0_i32_33 = arith.constant 0 : i32
    %33 = arith.cmpi eq, %arg2, %c0_i32_33 : i32
    %34 = arith.extui %33 : i1 to i32
    %c0_i32_34 = arith.constant 0 : i32
    %35 = arith.cmpi ne, %34, %c0_i32_34 : i32
    scf.if %35 {
      %c0_35 = arith.constant 0 : index
      %c0_36 = arith.constant 0 : index
      %c0_37 = arith.constant 0 : index
      %36 = vector.load %arg11[%c0_35, %c0_36, %c0_37] : memref<4x8x1xf32, #tpu.memory_space<vmem>>, vector<4x8x1xf32>
      %37 = tpu.reciprocal %36 {approx = true} : vector<4x8x1xf32> -> vector<4x8x1xf32>
      %c0_38 = arith.constant 0 : index
      %c0_39 = arith.constant 0 : index
      %c0_40 = arith.constant 0 : index
      %38 = vector.load %arg9[%c0_38, %c0_39, %c0_40] : memref<4x8x8xf32, #tpu.memory_space<vmem>>, vector<4x8x8xf32>
      %39 = vector.broadcast %37 : vector<4x8x1xf32> to vector<4x8x8xf32>
      %40 = arith.mulf %38, %39 : vector<4x8x8xf32>
      %41 = arith.truncf %40 : vector<4x8x8xf32> to vector<4x8x8xbf16>
      %c0_41 = arith.constant 0 : index
      %c0_42 = arith.constant 0 : index
      %c0_43 = arith.constant 0 : index
      %42 = vector.load %arg6[%c0_41, %c0_42, %c0_43] : memref<4x8x32xbf16, #tpu.memory_space<vmem>>, vector<4x8x32xbf16>
      %cst_44 = arith.constant dense<0.000000e+00> : vector<4x8x32xf32>
      %43 = tpu.matmul %41, %42, %cst_44 {dimension_numbers = #tpu.dot_dimension_numbers<[2], [1], [1], [2], [0, 0, 0, 1, 1, 2], [0], [0]>} : vector<4x8x8xbf16>, vector<4x8x32xbf16>, vector<4x8x32xf32> -> vector<4x8x32xf32>
      %cst_45 = arith.constant dense<0.000000e+00> : vector<8x32xf32>
      %44 = vector.multi_reduction <add>, %43, %cst_45 [0] : vector<4x8x32xf32> to vector<8x32xf32>
      %c0_46 = arith.constant 0 : index
      %c0_47 = arith.constant 0 : index
      %45 = vector.load %arg7[%c0_46, %c0_47] : memref<1x32xf32, #tpu.memory_space<vmem>>, vector<1x32xf32>
      %46 = vector.broadcast %45 : vector<1x32xf32> to vector<8x32xf32>
      %47 = arith.addf %44, %46 : vector<8x32xf32>
      %c0_48 = arith.constant 0 : index
      %c0_49 = arith.constant 0 : index
      %c0_50 = arith.constant 0 : index
      %48 = vector.load %arg8[%c0_48, %c0_49, %c0_50] : memref<1x8x32xf32, #tpu.memory_space<vmem>>, vector<1x8x32xf32>
      %49 = vector.shape_cast %48 : vector<1x8x32xf32> to vector<8x32xf32>
      %50 = vector.shape_cast %47 : vector<8x32xf32> to vector<1x8x32xf32>
      tpu.vector_store %arg8[%c0_48, %c0_49, %c0_50], %50 {strides = array<i32>} : memref<1x8x32xf32, #tpu.memory_space<vmem>>, vector<1x8x32xf32>,
    } else {
    }
    return
  }
  func.func @transform_0(%arg0: i32, %arg1: i32, %arg2: i32) -> (i32, i32, i32, i32) {
    %c0_i32 = arith.constant 0 : i32
    %c0_i32_0 = arith.constant 0 : i32
    %c0_i32_1 = arith.constant 0 : i32
    return %arg0, %c0_i32, %arg1, %c0_i32_0 : i32, i32, i32, i32
  }
  func.func @transform_1(%arg0: i32, %arg1: i32, %arg2: i32) -> (i32, i32, i32, i32) {
    %c0_i32 = arith.constant 0 : i32
    %c0_i32_0 = arith.constant 0 : i32
    %c0_i32_1 = arith.constant 0 : i32
    return %arg0, %c0_i32, %arg2, %c0_i32_0 : i32, i32, i32, i32
  }
  func.func @transform_2(%arg0: i32, %arg1: i32, %arg2: i32) -> (i32, i32, i32, i32) {
    %c0_i32 = arith.constant 0 : i32
    %c0_i32_0 = arith.constant 0 : i32
    %c0_i32_1 = arith.constant 0 : i32
    return %arg0, %c0_i32, %arg2, %c0_i32_0 : i32, i32, i32, i32
  }
  func.func @transform_3(%arg0: i32, %arg1: i32, %arg2: i32) -> (i32, i32, i32) {
    %c0_i32 = arith.constant 0 : i32
    %c0_i32_0 = arith.constant 0 : i32
    %c0_i32_1 = arith.constant 0 : i32
    %c0_i32_2 = arith.constant 0 : i32
    return %c0_i32, %c0_i32_0, %c0_i32_1 : i32, i32, i32
  }
  func.func @transform_4(%arg0: i32, %arg1: i32, %arg2: i32) -> (i32, i32) {
    %c0_i32 = arith.constant 0 : i32
    %c0_i32_0 = arith.constant 0 : i32
    %c0_i32_1 = arith.constant 0 : i32
    return %c0_i32, %c0_i32_0 : i32, i32
  }
  func.func @transform_5(%arg0: i32, %arg1: i32, %arg2: i32) -> (i32, i32, i32) {
    %c0_i32 = arith.constant 0 : i32
    %c0_i32_0 = arith.constant 0 : i32
    return %arg0, %arg1, %c0_i32 : i32, i32, i32
  }
}

</mosaic_0001>

<llo_original>
// kernel: tpu_custom_call.1
$region0: #{tpu_custom_call.1}
  #allocation0 [shape = 'u32[]', space=smem, size = 0x4, offset = 0x4, fixed_abs, tag = 'smem constant byte address 0x4 - core index']
  #allocation1 [shape = 'u32[144,128]{1,0:T(1,128)}', space=vmem, size = 0x12000, scoped, tag = 'internal scratch']
  #allocation2 [shape = 'f32[4,8,8]{2,1,0:T(8,128)}', space=vmem, size = 0x4000, scoped, tag = 'scratch operand']
  #allocation3 [shape = 'f32[4,8,1]{2,1,0:T(8,128)}', space=vmem, size = 0x4000, scoped, tag = 'scratch operand']
  #allocation4 [shape = 'f32[4,8,1]{2,1,0:T(8,128)}', space=vmem, size = 0x4000, scoped, tag = 'scratch operand']
  %s0 = inlined_call_operand.hbm [shape: bf16[2,4,8,8], index: 0, kind: input, shape index: {}]
  %s1 = inlined_call_operand.hbm [shape: bf16[2,4,8,8], index: 1, kind: input, shape index: {}]
  %s2 = inlined_call_operand.hbm [shape: bf16[2,4,8,8], index: 2, kind: input, shape index: {}]
  %s3 = inlined_call_operand.hbm [shape: bf16[4,8,32], index: 3, kind: input, shape index: {}]
  %s4 = inlined_call_operand.vmem [shape: f32[1,32], index: 4, kind: input, shape index: {}]
  %s5 = inlined_call_operand.hbm [shape: f32[2,8,32], index: 5, kind: output, shape index: {}]
  %s6 = sld [smem:[#allocation0]]
  $region77: #{tpu_custom_call.1} parent=0
    _
  %s8 = ssub.s32 1, %s6
  %s9 = scalar_select 0, %s8, %s6
  $region1: #{tpu_custom_call.1} parent=0
    #allocation5 [shape = 'u8[16384]{0}', space=vmem, size = 0x4000, scoped, tag = 'input window, operand 0']
    #allocation6 [shape = 's32[2]{0}', space=sflag, size = 0x8, scoped, tag = 'scoped memory for tpu_custom_call.1']
    #allocation7 [shape = 's32[2]{0}', space=sflag, size = 0x8, scoped, tag = 'scoped memory for tpu_custom_call.1']
    #allocation8 [shape = 'u8[16384]{0}', space=vmem, size = 0x4000, scoped, tag = 'input window, operand 1']
    #allocation9 [shape = 's32[2]{0}', space=sflag, size = 0x8, scoped, tag = 'scoped memory for tpu_custom_call.1']
    #allocation10 [shape = 'u8[16384]{0}', space=vmem, size = 0x4000, scoped, tag = 'input window, operand 2']
    #allocation11 [shape = 'u8[8192]{0}', space=vmem, size = 0x2000, scoped, tag = 'input window, operand 3, single buffered']
    #allocation12 [shape = 's32[1]{0}', space=sflag, size = 0x4, scoped, tag = 'scoped memory for tpu_custom_call.1']
    #allocation13 [shape = 'u8[8192]{0}', space=vmem, size = 0x2000, scoped, tag = 'output window, operand 0']
    %10 = vsyncpa [#allocation6], 0
    %s11 = scalar_lea.sflag [#allocation6], 1
    %12 = vsyncpa %s11, 0
    %13 = vsyncpa [#allocation9], 0
    %s14 = scalar_lea.sflag [#allocation9], 1
    %15 = vsyncpa %s14, 0
    %16 = vsyncpa [#allocation12], 0
    %17 = vsyncpa [#allocation7], 0
    %s18 = scalar_lea.sflag [#allocation7], 1
    %19 = vsyncpa %s18, 0
    loop: start=0, step=1, limit=4
    $region2: #{tpu_custom_call.1} parent=1 // loop_pre_header
      _
    $region3: #{tpu_custom_call.1} parent=1 // loop_header
      %s21 = sphi 0, %s25
      %p22 = scmp.ge.s32.totalorder %s21, 4
      %s28 = sphi 0, %s47
      %s29 = sphi 0, %s43
      %s30 = sphi 0, %s39
      %s31 = sphi 0, %s28
      %s32 = sphi 0, %s29
      %s33 = sphi 0, %s30
      %s34 = sphi 0, %s31
      %s35 = sphi 0, %s32
      %s36 = sphi 0, %s33
      %s52 = sphi 0, %s54
      %s55 = sphi 0, %s52
      %s56 = sphi 0, %s55
      %s72 = sphi 0, %s56
      %s80 = sphi 0, %s82
      %s83 = sphi 0, %s80
      %s84 = sphi 0, %s83
      %s100 = sphi 0, %s84
      %s108 = sphi 0, %s110
      %s111 = sphi 0, %s108
      %s112 = sphi 0, %s111
      %s128 = sphi 0, %s112
      %s132 = sphi 0, %s132
      %s134 = sphi 0, %s132
      %s135 = sphi 0, %s134
      %s149 = sphi 0, %s135
      %s153 = sphi 0, %s153
      %s155 = sphi 0, %s153
      %s156 = sphi 0, %s155
      %s170 = sphi 0, %s156
      %s178 = sphi 0, %s180
      %s181 = sphi 0, %s178
      %s182 = sphi 0, %s181
      %s198 = sphi 0, %s182
    $region4: #{tpu_custom_call.1} parent=1 // loop_header_branch
      %24 = sbr.rel (%p22) target = $region8
    $region5: #{tpu_custom_call.1} parent=1 // loop_body
      %s26 = ssub.s32 %s21, 1
      %s27 = ssub.s32 %s21, 2
      %s37 = sadd.s32 1, %s30
      %p38 = scmp.ge.s32.totalorder %s37, 1
      %s39 = scalar_select %p38, 0, %s37
      %s40 = sadd.s32 1, %s29
      %s41 = scalar_select %p38, %s40, %s29
      %p42 = scmp.ge.s32.totalorder %s41, 1
      %s43 = scalar_select %p42, 0, %s41
      %s44 = sadd.s32 1, %s28
      %s45 = scalar_select %p42, %s44, %s28
      %p46 = scmp.ge.s32.totalorder %s45, 2
      %s47 = scalar_select %p46, 0, %s45
      %s48 = ssub.s32 %s28, %s47
      %s49 = ssub.s32 %s29, %s43
      %s50 = sor.u32 %s48, %s49
      %p51 = scmp.eq.s32.totalorder %s50, 0
      %s53 = sadd.s32 %s52, 1
      %s54 = scalar_select %p51, %s52, %s53
      %p57 = pneg %p51
      %p58 = scmp.eq.s32.totalorder %s21, 1
      %p59 = por %p57, %p58
      %p60 = scmp.ne.s32.totalorder %s52, %s55
      %p61 = scmp.eq.s32.totalorder %s21, 0
      %p62 = por %p60, %p61
      %p63 = scmp.ne.s32.totalorder %s52, %s55
      %p64 = scmp.eq.s32.totalorder %s26, 1
      %p65 = por %p63, %p64
      %p66 = scmp.ne.s32.totalorder %s55, %s56
      %p67 = scmp.eq.s32.totalorder %s26, 0
      %p68 = por %p66, %p67
      %p69 = scmp.ne.s32.totalorder %s55, %s56
      %p70 = scmp.eq.s32.totalorder %s27, 1
      %p71 = por %p69, %p70
      %p73 = scmp.ne.s32.totalorder %s56, %s72
      %p74 = scmp.eq.s32.totalorder %s27, 0
      %p75 = por %p73, %p74
      %s76 = ssub.s32 %s28, %s47
      %s77 = ssub.s32 %s30, %s39
      %s78 = sor.u32 %s76, %s77
      %p79 = scmp.eq.s32.totalorder %s78, 0
      %s81 = sadd.s32 %s80, 1
      %s82 = scalar_select %p79, %s80, %s81
      %p85 = pneg %p79
      %p86 = scmp.eq.s32.totalorder %s21, 1
      %p87 = por %p85, %p86
      %p88 = scmp.ne.s32.totalorder %s80, %s83
      %p89 = scmp.eq.s32.totalorder %s21, 0
      %p90 = por %p88, %p89
      %p91 = scmp.ne.s32.totalorder %s80, %s83
      %p92 = scmp.eq.s32.totalorder %s26, 1
      %p93 = por %p91, %p92
      %p94 = scmp.ne.s32.totalorder %s83, %s84
      %p95 = scmp.eq.s32.totalorder %s26, 0
      %p96 = por %p94, %p95
      %p97 = scmp.ne.s32.totalorder %s83, %s84
      %p98 = scmp.eq.s32.totalorder %s27, 1
      %p99 = por %p97, %p98
      %p101 = scmp.ne.s32.totalorder %s84, %s100
      %p102 = scmp.eq.s32.totalorder %s27, 0
      %p103 = por %p101, %p102
      %s104 = ssub.s32 %s28, %s47
      %s105 = ssub.s32 %s30, %s39
      %s106 = sor.u32 %s104, %s105
      %p107 = scmp.eq.s32.totalorder %s106, 0
      %s109 = sadd.s32 %s108, 1
      %s110 = scalar_select %p107, %s108, %s109
      %p113 = pneg %p107
      %p114 = scmp.eq.s32.totalorder %s21, 1
      %p115 = por %p113, %p114
      %p116 = scmp.ne.s32.totalorder %s108, %s111
      %p117 = scmp.eq.s32.totalorder %s21, 0
      %p118 = por %p116, %p117
      %p119 = scmp.ne.s32.totalorder %s108, %s111
      %p120 = scmp.eq.s32.totalorder %s26, 1
      %p121 = por %p119, %p120
      %p122 = scmp.ne.s32.totalorder %s111, %s112
      %p123 = scmp.eq.s32.totalorder %s26, 0
      %p124 = por %p122, %p123
      %p125 = scmp.ne.s32.totalorder %s111, %s112
      %p126 = scmp.eq.s32.totalorder %s27, 1
      %p127 = por %p125, %p126
      %p129 = scmp.ne.s32.totalorder %s112, %s128
      %p130 = scmp.eq.s32.totalorder %s27, 0
      %p131 = por %p129, %p130
      %s133 = sadd.s32 %s132, 1
      %p136 = scmp.eq.s32.totalorder %s21, 1
      %p137 = scmp.ne.s32.totalorder %s132, %s134
      %p138 = scmp.eq.s32.totalorder %s21, 0
      %p139 = por %p137, %p138
      %p140 = scmp.ne.s32.totalorder %s132, %s134
      %p141 = scmp.eq.s32.totalorder %s26, 1
      %p142 = por %p140, %p141
      %p143 = scmp.ne.s32.totalorder %s134, %s135
      %p144 = scmp.eq.s32.totalorder %s26, 0
      %p145 = por %p143, %p144
      %p146 = scmp.ne.s32.totalorder %s134, %s135
      %p147 = scmp.eq.s32.totalorder %s27, 1
      %p148 = por %p146, %p147
      %p150 = scmp.ne.s32.totalorder %s135, %s149
      %p151 = scmp.eq.s32.totalorder %s27, 0
      %p152 = por %p150, %p151
      %s154 = sadd.s32 %s153, 1
      %p157 = scmp.eq.s32.totalorder %s21, 1
      %p158 = scmp.ne.s32.totalorder %s153, %s155
      %p159 = scmp.eq.s32.totalorder %s21, 0
      %p160 = por %p158, %p159
      %p161 = scmp.ne.s32.totalorder %s153, %s155
      %p162 = scmp.eq.s32.totalorder %s26, 1
      %p163 = por %p161, %p162
      %p164 = scmp.ne.s32.totalorder %s155, %s156
      %p165 = scmp.eq.s32.totalorder %s26, 0
      %p166 = por %p164, %p165
      %p167 = scmp.ne.s32.totalorder %s155, %s156
      %p168 = scmp.eq.s32.totalorder %s27, 1
      %p169 = por %p167, %p168
      %p171 = scmp.ne.s32.totalorder %s156, %s170
      %p172 = scmp.eq.s32.totalorder %s27, 0
      %p173 = por %p171, %p172
      %s174 = ssub.s32 %s28, %s47
      %s175 = ssub.s32 %s29, %s43
      %s176 = sor.u32 %s174, %s175
      %p177 = scmp.eq.s32.totalorder %s176, 0
      %s179 = sadd.s32 %s178, 1
      %s180 = scalar_select %p177, %s178, %s179
      %p183 = pneg %p177
      %p184 = scmp.eq.s32.totalorder %s21, 1
      %p185 = por %p183, %p184
      %p186 = scmp.ne.s32.totalorder %s178, %s181
      %p187 = scmp.eq.s32.totalorder %s21, 0
      %p188 = por %p186, %p187
      %p189 = scmp.ne.s32.totalorder %s178, %s181
      %p190 = scmp.eq.s32.totalorder %s26, 1
      %p191 = por %p189, %p190
      %p192 = scmp.ne.s32.totalorder %s181, %s182
      %p193 = scmp.eq.s32.totalorder %s26, 0
      %p194 = por %p192, %p193
      %p195 = scmp.ne.s32.totalorder %s181, %s182
      %p196 = scmp.eq.s32.totalorder %s27, 1
      %p197 = por %p195, %p196
      %p199 = scmp.ne.s32.totalorder %s182, %s198
      %p200 = scmp.eq.s32.totalorder %s27, 0
      %p201 = por %p199, %p200
      %p202 = scmp.le.s32.totalorder 1, %s21
      %p203 = scmp.lt.s32.totalorder %s21, 3
      %p204 = pnand %p202, %p203
      %p205 = pneg %p204
      // Predicated region
      $region9: #{tpu_custom_call.1} parent=5 // pred_check
        _
      $region10: #{tpu_custom_call.1} parent=5 // pred_check_branch
        %207 = sbr.rel (%p204) target = $region12
      $region11: #{tpu_custom_call.1} parent=5 // pred_region
        %s208 = ssub.s32 %s21, 1
        // Predicated region
        $region13: #{tpu_custom_call.1} parent=11 // pred_check
          %p209 = pneg %p145
        $region14: #{tpu_custom_call.1} parent=11 // pred_check_branch
          %211 = sbr.rel (%p209) target = $region16
        $region15: #{tpu_custom_call.1} parent=11 // pred_region
          %s213 = ssub.s32 256, 256
          %214 = vsyncadd [#allocation12], %s213
          %s215 = sshll.u32 [#allocation11], 4
          %s216 = int_to_ptr.vmem [resolvable:$true] %s215
          %221 = dma.hbm_to_vmem [thread:$0]  %s3, 256, %s216, [#allocation12], 64, 64, 4
        $region16: #{tpu_custom_call.1} parent=11 // pred_fallthru
          _
        // Predicated region
        $region17: #{tpu_custom_call.1} parent=11 // pred_check
          %p222 = pneg %p166
        $region18: #{tpu_custom_call.1} parent=11 // pred_check_branch
          %224 = sbr.rel (%p222) target = $region20
        $region19: #{tpu_custom_call.1} parent=11 // pred_region
          _
        $region20: #{tpu_custom_call.1} parent=11 // pred_fallthru
          _
      $region12: #{tpu_custom_call.1} parent=5 // pred_fallthru
        _
      %p225 = scmp.lt.s32.totalorder %s21, 2
      // Predicated region
      $region21: #{tpu_custom_call.1} parent=5 // pred_check
        %p226 = pneg %p225
      $region22: #{tpu_custom_call.1} parent=5 // pred_check_branch
        %228 = sbr.rel (%p226) target = $region24
      $region23: #{tpu_custom_call.1} parent=5 // pred_region
        // Predicated region
        $region25: #{tpu_custom_call.1} parent=23 // pred_check
          %p229 = pneg %p62
        $region26: #{tpu_custom_call.1} parent=23 // pred_check_branch
          %231 = sbr.rel (%p229) target = $region28
        $region27: #{tpu_custom_call.1} parent=23 // pred_region
          %s232 = sand.u32 %s52, 1
          %s233 = scalar_lea.sflag [#allocation6], %s232
          %s234 = sand.u32 %s52, 1
          %s235 = smul.addr %s234, 16
          %s236 = scalar_lea.vmem [#allocation5], %s235
          %s238 = ssub.s32 256, 256
          %239 = vsyncadd %s233, %s238
          %s240 = smul.addr %s28, 4
          %s241 = sadd.s32 %s29, %s240
          %s242 = smul.addr %s241, 64
          %s243 = scalar_lea.hbm %s0, %s242
          %s244 = sshll.u32 %s236, 4
          %s245 = int_to_ptr.vmem [resolvable:$true] %s244
          %250 = dma.hbm_to_vmem [thread:$0]  %s243, 256, %s245, %s233, 64, 64, 4
        $region28: #{tpu_custom_call.1} parent=23 // pred_fallthru
          _
        // Predicated region
        $region29: #{tpu_custom_call.1} parent=23 // pred_check
          %p251 = pneg %p90
        $region30: #{tpu_custom_call.1} parent=23 // pred_check_branch
          %253 = sbr.rel (%p251) target = $region32
        $region31: #{tpu_custom_call.1} parent=23 // pred_region
          %s254 = sand.u32 %s21, 1
          %s255 = scalar_lea.sflag [#allocation9], %s254
          %s256 = sand.u32 %s80, 1
          %s257 = smul.addr %s256, 16
          %s258 = scalar_lea.vmem [#allocation8], %s257
          %s260 = ssub.s32 256, 256
          %261 = vsyncadd %s255, %s260
          %s262 = smul.addr %s28, 4
          %s263 = sadd.s32 %s30, %s262
          %s264 = smul.addr %s263, 64
          %s265 = scalar_lea.hbm %s1, %s264
          %s266 = sshll.u32 %s258, 4
          %s267 = int_to_ptr.vmem [resolvable:$true] %s266
          %272 = dma.hbm_to_vmem [thread:$0]  %s265, 256, %s267, %s255, 64, 64, 4
        $region32: #{tpu_custom_call.1} parent=23 // pred_fallthru
          _
        // Predicated region
        $region33: #{tpu_custom_call.1} parent=23 // pred_check
          %p273 = pneg %p118
        $region34: #{tpu_custom_call.1} parent=23 // pred_check_branch
          %275 = sbr.rel (%p273) target = $region36
        $region35: #{tpu_custom_call.1} parent=23 // pred_region
          %s276 = sand.u32 %s21, 1
          %s277 = scalar_lea.sflag [#allocation9], %s276
          %s278 = sand.u32 %s108, 1
          %s279 = smul.addr %s278, 16
          %s280 = scalar_lea.vmem [#allocation10], %s279
          %s282 = ssub.s32 256, 256
          %283 = vsyncadd %s277, %s282
          %s284 = smul.addr %s28, 4
          %s285 = sadd.s32 %s30, %s284
          %s286 = smul.addr %s285, 64
          %s287 = scalar_lea.hbm %s2, %s286
          %s288 = sshll.u32 %s280, 4
          %s289 = int_to_ptr.vmem [resolvable:$true] %s288
          %294 = dma.hbm_to_vmem [thread:$0]  %s287, 256, %s289, %s277, 64, 64, 4
        $region36: #{tpu_custom_call.1} parent=23 // pred_fallthru
          _
      $region24: #{tpu_custom_call.1} parent=5 // pred_fallthru
        _
      %p295 = scmp.le.s32.totalorder 1, %s21
      %p296 = scmp.lt.s32.totalorder %s21, 3
      %p297 = pnand %p295, %p296
      %p298 = pneg %p297
      // Predicated region
      $region37: #{tpu_custom_call.1} parent=5 // pred_check
        _
      $region38: #{tpu_custom_call.1} parent=5 // pred_check_branch
        %300 = sbr.rel (%p297) target = $region40
      $region39: #{tpu_custom_call.1} parent=5 // pred_region
        %s301 = ssub.s32 %s21, 1
        %s302 = sand.u32 %s55, 1
        %s303 = scalar_lea.sflag [#allocation6], %s302
        %s304 = sand.u32 %s55, 1
        %s305 = smul.addr %s304, 16
        %s306 = scalar_lea.vmem [#allocation5], %s305
        // Predicated region
        $region41: #{tpu_custom_call.1} parent=39 // pred_check
          %p307 = pneg %p68
        $region42: #{tpu_custom_call.1} parent=39 // pred_check_branch
          %309 = sbr.rel (%p307) target = $region44
        $region43: #{tpu_custom_call.1} parent=39 // pred_region
          %310 = dma.done %s303, 256
        $region44: #{tpu_custom_call.1} parent=39 // pred_fallthru
          _
        %s311 = sand.u32 %s26, 1
        %s312 = scalar_lea.sflag [#allocation9], %s311
        %s313 = sand.u32 %s83, 1
        %s314 = smul.addr %s313, 16
        %s315 = scalar_lea.vmem [#allocation8], %s314
        // Predicated region
        $region45: #{tpu_custom_call.1} parent=39 // pred_check
          %p316 = pneg %p96
        $region46: #{tpu_custom_call.1} parent=39 // pred_check_branch
          %318 = sbr.rel (%p316) target = $region48
        $region47: #{tpu_custom_call.1} parent=39 // pred_region
          %319 = dma.done %s312, 256
        $region48: #{tpu_custom_call.1} parent=39 // pred_fallthru
          _
        %s320 = sand.u32 %s26, 1
        %s321 = scalar_lea.sflag [#allocation9], %s320
        %s322 = sand.u32 %s111, 1
        %s323 = smul.addr %s322, 16
        %s324 = scalar_lea.vmem [#allocation10], %s323
        // Predicated region
        $region49: #{tpu_custom_call.1} parent=39 // pred_check
          %p325 = pneg %p124
        $region50: #{tpu_custom_call.1} parent=39 // pred_check_branch
          %327 = sbr.rel (%p325) target = $region52
        $region51: #{tpu_custom_call.1} parent=39 // pred_region
          %328 = dma.done %s321, 256
        $region52: #{tpu_custom_call.1} parent=39 // pred_fallthru
          _
        // Predicated region
        $region53: #{tpu_custom_call.1} parent=39 // pred_check
          %p329 = pneg %p145
        $region54: #{tpu_custom_call.1} parent=39 // pred_check_branch
          %331 = sbr.rel (%p329) target = $region56
        $region55: #{tpu_custom_call.1} parent=39 // pred_region
          %332 = dma.done [#allocation12], 256
        $region56: #{tpu_custom_call.1} parent=39 // pred_fallthru
          _
        %s333 = sand.u32 %s55, 1
        %s334 = scalar_lea.sflag [#allocation6], %s333
        %s335 = sand.u32 %s55, 1
        %s336 = smul.addr %s335, 16
        %s337 = scalar_lea.vmem [#allocation5], %s336
        %p338 = pneg %p68
        %p339 = pneg %p65
        %s340 = sand.u32 %s26, 1
        %s341 = scalar_lea.sflag [#allocation9], %s340
        %s342 = sand.u32 %s83, 1
        %s343 = smul.addr %s342, 16
        %s344 = scalar_lea.vmem [#allocation8], %s343
        %p345 = pneg %p96
        %p346 = pneg %p93
        %s347 = sand.u32 %s26, 1
        %s348 = scalar_lea.sflag [#allocation9], %s347
        %s349 = sand.u32 %s111, 1
        %s350 = smul.addr %s349, 16
        %s351 = scalar_lea.vmem [#allocation10], %s350
        %p352 = pneg %p124
        %p353 = pneg %p121
        %p354 = pneg %p145
        %p355 = pneg %p142
        %p356 = pneg %p166
        %p357 = pneg %p163
        %p358 = pneg %p194
        %p359 = pneg %p191
        %s360 = sand.u32 %s181, 1
        %s361 = scalar_lea.sflag [#allocation7], %s360
        %s362 = sand.u32 %s181, 1
        %s363 = smul.addr %s362, 8
        %s364 = scalar_lea.vmem [#allocation13], %s363
        %p366 = scmp.eq.s32.totalorder %s33, 0
        // Predicated region
        $region57: #{tpu_custom_call.1} parent=39 // pred_check
          %p367 = pneg %p366
        $region58: #{tpu_custom_call.1} parent=39 // pred_check_branch
          %369 = sbr.rel (%p367) target = $region60
        $region59: #{tpu_custom_call.1} parent=39 // pred_region
          %vm370 = vcmask 7168
          %371 = vst.msk [vmem:[#allocation3] sm:$0xff] %vm370, -inf
          %372 = vst.msk [vmem:[#allocation3 + $0x8] sm:$0xff] %vm370, -inf
          %373 = vst.msk [vmem:[#allocation3 + $0x10] sm:$0xff] %vm370, -inf
          %374 = vst.msk [vmem:[#allocation3 + $0x18] sm:$0xff] %vm370, -inf
          %375 = vst.msk [vmem:[#allocation4] sm:$0xff] %vm370, 0.0
          %376 = vst.msk [vmem:[#allocation4 + $0x8] sm:$0xff] %vm370, 0.0
          %377 = vst.msk [vmem:[#allocation4 + $0x10] sm:$0xff] %vm370, 0.0
          %378 = vst.msk [vmem:[#allocation4 + $0x18] sm:$0xff] %vm370, 0.0
          %vm379 = vcmask 64512
          %380 = vst.msk [vmem:[#allocation2] sm:$0xff] %vm379, 0.0
          %381 = vst.msk [vmem:[#allocation2 + $0x8] sm:$0xff] %vm379, 0.0
          %382 = vst.msk [vmem:[#allocation2 + $0x10] sm:$0xff] %vm379, 0.0
          %383 = vst.msk [vmem:[#allocation2 + $0x18] sm:$0xff] %vm379, 0.0
        $region60: #{tpu_custom_call.1} parent=39 // pred_fallthru
          _
        %v384 = vld [vmem:[%s306] sm:$0xf]
        %v385 = vld [vmem:[%s306 + $0x4] sm:$0xf]
        %v386 = vld [vmem:[%s306 + $0x8] sm:$0xf]
        %v387 = vld [vmem:[%s306 + $0xc] sm:$0xf]
        %v388 = vld [vmem:[%s315] sm:$0xf]
        %v389 = vld [vmem:[%s315 + $0x4] sm:$0xf]
        %v390 = vld [vmem:[%s315 + $0x8] sm:$0xf]
        %v391 = vld [vmem:[%s315 + $0xc] sm:$0xf]
        %v392 = vld [vmem:[%s324] sm:$0xf]
        %v393 = vld [vmem:[%s324 + $0x4] sm:$0xf]
        %v394 = vld [vmem:[%s324 + $0x8] sm:$0xf]
        %v395 = vld [vmem:[%s324 + $0xc] sm:$0xf]
        %vm396 = vcmask 64512
        %v398 = vsel %vm396, %v384, 0
        %v401 = vsel %vm396, %v388, 0
        %403 = vmatprep.subr.bf16.mxu0 0
        %404 = vmatpush1.bf16.xpose.msra.mxu0 %v401
        %405 = vmatprep.subr.bf16.mxu0 0
        %406 = vmatpush1.bf16.xpose.msra.mxu0 0
        %407 = vmatprep.subr.bf16.mxu0 0
        %408 = vmatpush1.bf16.xpose.msra.mxu0 0
        %409 = vmatprep.subr.bf16.mxu0 0
        %410 = vmatpush1.bf16.xpose.msra.mxu0 0
        %411 = vmatprep.subr.bf16.mxu0 0
        %412 = vmatpush1.bf16.xpose.msra.mxu0 0
        %413 = vmatprep.subr.bf16.mxu0 0
        %414 = vmatpush1.bf16.xpose.msra.mxu0 0
        %415 = vmatprep.subr.bf16.mxu0 0
        %416 = vmatpush1.bf16.xpose.msra.mxu0 0
        %417 = vmatprep.subr.bf16.mxu0 0
        %418 = vmatpush1.bf16.xpose.msra.mxu0 0
        %419 = vmatprep.subr.bf16.mxu0 0
        %420 = vmatpush1.bf16.xpose.msra.mxu0 0
        %421 = vmatprep.subr.bf16.mxu0 0
        %422 = vmatpush1.bf16.xpose.msra.mxu0 0
        %423 = vmatprep.subr.bf16.mxu0 0
        %424 = vmatpush1.bf16.xpose.msra.mxu0 0
        %425 = vmatprep.subr.bf16.mxu0 0
        %426 = vmatpush1.bf16.xpose.msra.mxu0 0
        %427 = vmatprep.subr.bf16.mxu0 0
        %428 = vmatpush1.bf16.xpose.msra.mxu0 0
        %429 = vmatprep.subr.bf16.mxu0 0
        %430 = vmatpush1.bf16.xpose.msra.mxu0 0
        %431 = vmatprep.subr.bf16.mxu0 0
        %432 = vmatpush1.bf16.xpose.msra.mxu0 0
        %433 = vmatprep.subr.bf16.mxu0 0
        %434 = vmatpush1.bf16.xpose.msra.mxu0 0
        %435 = vmatprep.mubr.bf16.mxu0 0
        %436 = vmatmul.mubr.bf16.gmra.mrb[0].mxu0 %v398
        %v437 = vpop.f32.mrb[0].mxu0
        %v438 = vadd.f32 0.0, %v437
        %v439 = vpop.f32.mrb[0].mxu0
        %v440 = vpop.f32.mrb[0].mxu0
        %v441 = vpop.f32.mrb[0].mxu0
        %442 = vdwg.mxu0
        %v444 = vsel %vm396, %v385, 0
        %v447 = vsel %vm396, %v389, 0
        %449 = vmatprep.subr.bf16.mxu0 0
        %450 = vmatpush1.bf16.xpose.msra.mxu0 %v447
        %451 = vmatprep.subr.bf16.mxu0 0
        %452 = vmatpush1.bf16.xpose.msra.mxu0 0
        %453 = vmatprep.subr.bf16.mxu0 0
        %454 = vmatpush1.bf16.xpose.msra.mxu0 0
        %455 = vmatprep.subr.bf16.mxu0 0
        %456 = vmatpush1.bf16.xpose.msra.mxu0 0
        %457 = vmatprep.subr.bf16.mxu0 0
        %458 = vmatpush1.bf16.xpose.msra.mxu0 0
        %459 = vmatprep.subr.bf16.mxu0 0
        %460 = vmatpush1.bf16.xpose.msra.mxu0 0
        %461 = vmatprep.subr.bf16.mxu0 0
        %462 = vmatpush1.bf16.xpose.msra.mxu0 0
        %463 = vmatprep.subr.bf16.mxu0 0
        %464 = vmatpush1.bf16.xpose.msra.mxu0 0
        %465 = vmatprep.subr.bf16.mxu0 0
        %466 = vmatpush1.bf16.xpose.msra.mxu0 0
        %467 = vmatprep.subr.bf16.mxu0 0
        %468 = vmatpush1.bf16.xpose.msra.mxu0 0
        %469 = vmatprep.subr.bf16.mxu0 0
        %470 = vmatpush1.bf16.xpose.msra.mxu0 0
        %471 = vmatprep.subr.bf16.mxu0 0
        %472 = vmatpush1.bf16.xpose.msra.mxu0 0
        %473 = vmatprep.subr.bf16.mxu0 0
        %474 = vmatpush1.bf16.xpose.msra.mxu0 0
        %475 = vmatprep.subr.bf16.mxu0 0
        %476 = vmatpush1.bf16.xpose.msra.mxu0 0
        %477 = vmatprep.subr.bf16.mxu0 0
        %478 = vmatpush1.bf16.xpose.msra.mxu0 0
        %479 = vmatprep.subr.bf16.mxu0 0
        %480 = vmatpush1.bf16.xpose.msra.mxu0 0
        %481 = vmatprep.mubr.bf16.mxu0 0
        %482 = vmatmul.mubr.bf16.gmra.mrb[0].mxu0 %v444
        %v483 = vpop.f32.mrb[0].mxu0
        %v484 = vadd.f32 0.0, %v483
        %v485 = vpop.f32.mrb[0].mxu0
        %v486 = vpop.f32.mrb[0].mxu0
        %v487 = vpop.f32.mrb[0].mxu0
        %488 = vdwg.mxu0
        %v490 = vsel %vm396, %v386, 0
        %v493 = vsel %vm396, %v390, 0
        %495 = vmatprep.subr.bf16.mxu0 0
        %496 = vmatpush1.bf16.xpose.msra.mxu0 %v493
        %497 = vmatprep.subr.bf16.mxu0 0
        %498 = vmatpush1.bf16.xpose.msra.mxu0 0
        %499 = vmatprep.subr.bf16.mxu0 0
        %500 = vmatpush1.bf16.xpose.msra.mxu0 0
        %501 = vmatprep.subr.bf16.mxu0 0
        %502 = vmatpush1.bf16.xpose.msra.mxu0 0
        %503 = vmatprep.subr.bf16.mxu0 0
        %504 = vmatpush1.bf16.xpose.msra.mxu0 0
        %505 = vmatprep.subr.bf16.mxu0 0
        %506 = vmatpush1.bf16.xpose.msra.mxu0 0
        %507 = vmatprep.subr.bf16.mxu0 0
        %508 = vmatpush1.bf16.xpose.msra.mxu0 0
        %509 = vmatprep.subr.bf16.mxu0 0
        %510 = vmatpush1.bf16.xpose.msra.mxu0 0
        %511 = vmatprep.subr.bf16.mxu0 0
        %512 = vmatpush1.bf16.xpose.msra.mxu0 0
        %513 = vmatprep.subr.bf16.mxu0 0
        %514 = vmatpush1.bf16.xpose.msra.mxu0 0
        %515 = vmatprep.subr.bf16.mxu0 0
        %516 = vmatpush1.bf16.xpose.msra.mxu0 0
        %517 = vmatprep.subr.bf16.mxu0 0
        %518 = vmatpush1.bf16.xpose.msra.mxu0 0
        %519 = vmatprep.subr.bf16.mxu0 0
        %520 = vmatpush1.bf16.xpose.msra.mxu0 0
        %521 = vmatprep.subr.bf16.mxu0 0
        %522 = vmatpush1.bf16.xpose.msra.mxu0 0
        %523 = vmatprep.subr.bf16.mxu0 0
        %524 = vmatpush1.bf16.xpose.msra.mxu0 0
        %525 = vmatprep.subr.bf16.mxu0 0
        %526 = vmatpush1.bf16.xpose.msra.mxu0 0
        %527 = vmatprep.mubr.bf16.mxu0 0
        %528 = vmatmul.mubr.bf16.gmra.mrb[0].mxu0 %v490
        %v529 = vpop.f32.mrb[0].mxu0
        %v530 = vadd.f32 0.0, %v529
        %v531 = vpop.f32.mrb[0].mxu0
        %v532 = vpop.f32.mrb[0].mxu0
        %v533 = vpop.f32.mrb[0].mxu0
        %534 = vdwg.mxu0
        %v536 = vsel %vm396, %v387, 0
        %v539 = vsel %vm396, %v391, 0
        %541 = vmatprep.subr.bf16.mxu0 0
        %542 = vmatpush1.bf16.xpose.msra.mxu0 %v539
        %543 = vmatprep.subr.bf16.mxu0 0
        %544 = vmatpush1.bf16.xpose.msra.mxu0 0
        %545 = vmatprep.subr.bf16.mxu0 0
        %546 = vmatpush1.bf16.xpose.msra.mxu0 0
        %547 = vmatprep.subr.bf16.mxu0 0
        %548 = vmatpush1.bf16.xpose.msra.mxu0 0
        %549 = vmatprep.subr.bf16.mxu0 0
        %550 = vmatpush1.bf16.xpose.msra.mxu0 0
        %551 = vmatprep.subr.bf16.mxu0 0
        %552 = vmatpush1.bf16.xpose.msra.mxu0 0
        %553 = vmatprep.subr.bf16.mxu0 0
        %554 = vmatpush1.bf16.xpose.msra.mxu0 0
        %555 = vmatprep.subr.bf16.mxu0 0
        %556 = vmatpush1.bf16.xpose.msra.mxu0 0
        %557 = vmatprep.subr.bf16.mxu0 0
        %558 = vmatpush1.bf16.xpose.msra.mxu0 0
        %559 = vmatprep.subr.bf16.mxu0 0
        %560 = vmatpush1.bf16.xpose.msra.mxu0 0
        %561 = vmatprep.subr.bf16.mxu0 0
        %562 = vmatpush1.bf16.xpose.msra.mxu0 0
        %563 = vmatprep.subr.bf16.mxu0 0
        %564 = vmatpush1.bf16.xpose.msra.mxu0 0
        %565 = vmatprep.subr.bf16.mxu0 0
        %566 = vmatpush1.bf16.xpose.msra.mxu0 0
        %567 = vmatprep.subr.bf16.mxu0 0
        %568 = vmatpush1.bf16.xpose.msra.mxu0 0
        %569 = vmatprep.subr.bf16.mxu0 0
        %570 = vmatpush1.bf16.xpose.msra.mxu0 0
        %571 = vmatprep.subr.bf16.mxu0 0
        %572 = vmatpush1.bf16.xpose.msra.mxu0 0
        %573 = vmatprep.mubr.bf16.mxu0 0
        %574 = vmatmul.mubr.bf16.gmra.mrb[0].mxu0 %v536
        %v575 = vpop.f32.mrb[0].mxu0
        %v576 = vadd.f32 0.0, %v575
        %v577 = vpop.f32.mrb[0].mxu0
        %v578 = vpop.f32.mrb[0].mxu0
        %v579 = vpop.f32.mrb[0].mxu0
        %580 = vdwg.mxu0
        %v581 = vld [vmem:[#allocation3] sm:$0xff]
        %v582 = vld [vmem:[#allocation3 + $0x8] sm:$0xff]
        %v583 = vld [vmem:[#allocation3 + $0x10] sm:$0xff]
        %v584 = vld [vmem:[#allocation3 + $0x18] sm:$0xff]
        %v585 = vsel %vm396, %v438, -inf
        %586 = vmax.xlane.f32.xlu0 %v585
        %v587 = vpop.xlane.xlu0 %586
        %v588 = vsel %vm396, %v484, -inf
        %589 = vmax.xlane.f32.xlu0 %v588
        %v590 = vpop.xlane.xlu0 %589
        %v591 = vsel %vm396, %v530, -inf
        %592 = vmax.xlane.f32.xlu0 %v591
        %v593 = vpop.xlane.xlu0 %592
        %v594 = vsel %vm396, %v576, -inf
        %595 = vmax.xlane.f32.xlu0 %v594
        %v596 = vpop.xlane.xlu0 %595
        %v597 = vmax.f32 %v581, %v587
        %v598 = vmax.f32 %v582, %v590
        %v599 = vmax.f32 %v583, %v593
        %v600 = vmax.f32 %v584, %v596
        %v601 = vsub.f32 %v581, %v597
        %v602 = vsub.f32 %v582, %v598
        %v603 = vsub.f32 %v583, %v599
        %v604 = vsub.f32 %v584, %v600
        %v605 = vmul.f32 %v601, 1.442695
        %v606 = vpow.pop %v605
        %v607 = vmul.f32 %v602, 1.442695
        %v608 = vpow.pop %v607
        %v609 = vmul.f32 %v603, 1.442695
        %v610 = vpow.pop %v609
        %v611 = vmul.f32 %v604, 1.442695
        %v612 = vpow.pop %v611
        %614 = vset.pattern.permute.xlu0 0
        %615 = vperm.xlu0 %614, %v597
        %v616 = vpop.permute.xlu0 %615
        %619 = vset.pattern.permute.xlu0 0
        %620 = vperm.xlu0 %619, %v598
        %v621 = vpop.permute.xlu0 %620
        %624 = vset.pattern.permute.xlu0 0
        %625 = vperm.xlu0 %624, %v599
        %v626 = vpop.permute.xlu0 %625
        %629 = vset.pattern.permute.xlu0 0
        %630 = vperm.xlu0 %629, %v600
        %v631 = vpop.permute.xlu0 %630
        %v633 = vsub.f32 %v438, %v616
        %v634 = vsub.f32 %v484, %v621
        %v635 = vsub.f32 %v530, %v626
        %v636 = vsub.f32 %v576, %v631
        %v637 = vmul.f32 %v633, 1.442695
        %v638 = vpow.pop %v637
        %v639 = vmul.f32 %v634, 1.442695
        %v640 = vpow.pop %v639
        %v641 = vmul.f32 %v635, 1.442695
        %v642 = vpow.pop %v641
        %v643 = vmul.f32 %v636, 1.442695
        %v644 = vpow.pop %v643
        %v645 = vld [vmem:[#allocation4] sm:$0xff]
        %v646 = vld [vmem:[#allocation4 + $0x8] sm:$0xff]
        %v647 = vld [vmem:[#allocation4 + $0x10] sm:$0xff]
        %v648 = vld [vmem:[#allocation4 + $0x18] sm:$0xff]
        %v649 = vmul.f32 %v606, %v645
        %v650 = vmul.f32 %v608, %v646
        %v651 = vmul.f32 %v610, %v647
        %v652 = vmul.f32 %v612, %v648
        %v653 = vsel %vm396, %v638, 0.0
        %654 = vadd.xlane.f32.xlu0 %v653
        %v655 = vpop.xlane.xlu0 %654
        %v656 = vsel %vm396, %v640, 0.0
        %657 = vadd.xlane.f32.xlu0 %v656
        %v658 = vpop.xlane.xlu0 %657
        %v659 = vsel %vm396, %v642, 0.0
        %660 = vadd.xlane.f32.xlu0 %v659
        %v661 = vpop.xlane.xlu0 %660
        %v662 = vsel %vm396, %v644, 0.0
        %663 = vadd.xlane.f32.xlu0 %v662
        %v664 = vpop.xlane.xlu0 %663
        %v665 = vadd.f32 %v649, %v655
        %v666 = vadd.f32 %v650, %v658
        %v667 = vadd.f32 %v651, %v661
        %v668 = vadd.f32 %v652, %v664
        %vm669 = vcmask 7168
        %670 = vst.msk [vmem:[#allocation4] sm:$0xff] %vm669, %v665
        %671 = vst.msk [vmem:[#allocation4 + $0x8] sm:$0xff] %vm669, %v666
        %672 = vst.msk [vmem:[#allocation4 + $0x10] sm:$0xff] %vm669, %v667
        %673 = vst.msk [vmem:[#allocation4 + $0x18] sm:$0xff] %vm669, %v668
        %674 = vst.msk [vmem:[#allocation3] sm:$0xff] %vm669, %v597
        %675 = vst.msk [vmem:[#allocation3 + $0x8] sm:$0xff] %vm669, %v598
        %676 = vst.msk [vmem:[#allocation3 + $0x10] sm:$0xff] %vm669, %v599
        %677 = vst.msk [vmem:[#allocation3 + $0x18] sm:$0xff] %vm669, %v600
        %v678 = vpack.c.bf16 %v638, %v638
        %v679 = vpack.c.bf16 %v640, %v640
        %v680 = vpack.c.bf16 %v642, %v642
        %v681 = vpack.c.bf16 %v644, %v644
        %v683 = vsel %vm396, %v678, 0
        %vm685 = vcmask 1043456
        %v687 = vsel %vm685, %v392, 0
        %689 = vmatprep.subr.bf16.mxu0 0
        %690 = vmatpush1.bf16.msra.mxu0 %v687
        %691 = vmatprep.subr.bf16.mxu0 0
        %692 = vmatpush1.bf16.msra.mxu0 0
        %693 = vmatprep.subr.bf16.mxu0 0
        %694 = vmatpush1.bf16.msra.mxu0 0
        %695 = vmatprep.subr.bf16.mxu0 0
        %696 = vmatpush1.bf16.msra.mxu0 0
        %697 = vmatprep.subr.bf16.mxu0 0
        %698 = vmatpush1.bf16.msra.mxu0 0
        %699 = vmatprep.subr.bf16.mxu0 0
        %700 = vmatpush1.bf16.msra.mxu0 0
        %701 = vmatprep.subr.bf16.mxu0 0
        %702 = vmatpush1.bf16.msra.mxu0 0
        %703 = vmatprep.subr.bf16.mxu0 0
        %704 = vmatpush1.bf16.msra.mxu0 0
        %705 = vmatprep.subr.bf16.mxu0 0
        %706 = vmatpush1.bf16.msra.mxu0 0
        %707 = vmatprep.subr.bf16.mxu0 0
        %708 = vmatpush1.bf16.msra.mxu0 0
        %709 = vmatprep.subr.bf16.mxu0 0
        %710 = vmatpush1.bf16.msra.mxu0 0
        %711 = vmatprep.subr.bf16.mxu0 0
        %712 = vmatpush1.bf16.msra.mxu0 0
        %713 = vmatprep.subr.bf16.mxu0 0
        %714 = vmatpush1.bf16.msra.mxu0 0
        %715 = vmatprep.subr.bf16.mxu0 0
        %716 = vmatpush1.bf16.msra.mxu0 0
        %717 = vmatprep.subr.bf16.mxu0 0
        %718 = vmatpush1.bf16.msra.mxu0 0
        %719 = vmatprep.subr.bf16.mxu0 0
        %720 = vmatpush1.bf16.msra.mxu0 0
        %721 = vmatprep.mubr.bf16.mxu0 0
        %722 = vmatmul.mubr.bf16.gmra.mrb[0].mxu0 %v683
        %v723 = vpop.f32.mrb[0].mxu0
        %v724 = vadd.f32 0.0, %v723
        %v725 = vpop.f32.mrb[0].mxu0
        %v726 = vpop.f32.mrb[0].mxu0
        %v727 = vpop.f32.mrb[0].mxu0
        %728 = vdwg.mxu0
        %v730 = vsel %vm396, %v679, 0
        %v733 = vsel %vm685, %v393, 0
        %735 = vmatprep.subr.bf16.mxu0 0
        %736 = vmatpush1.bf16.msra.mxu0 %v733
        %737 = vmatprep.subr.bf16.mxu0 0
        %738 = vmatpush1.bf16.msra.mxu0 0
        %739 = vmatprep.subr.bf16.mxu0 0
        %740 = vmatpush1.bf16.msra.mxu0 0
        %741 = vmatprep.subr.bf16.mxu0 0
        %742 = vmatpush1.bf16.msra.mxu0 0
        %743 = vmatprep.subr.bf16.mxu0 0
        %744 = vmatpush1.bf16.msra.mxu0 0
        %745 = vmatprep.subr.bf16.mxu0 0
        %746 = vmatpush1.bf16.msra.mxu0 0
        %747 = vmatprep.subr.bf16.mxu0 0
        %748 = vmatpush1.bf16.msra.mxu0 0
        %749 = vmatprep.subr.bf16.mxu0 0
        %750 = vmatpush1.bf16.msra.mxu0 0
        %751 = vmatprep.subr.bf16.mxu0 0
        %752 = vmatpush1.bf16.msra.mxu0 0
        %753 = vmatprep.subr.bf16.mxu0 0
        %754 = vmatpush1.bf16.msra.mxu0 0
        %755 = vmatprep.subr.bf16.mxu0 0
        %756 = vmatpush1.bf16.msra.mxu0 0
        %757 = vmatprep.subr.bf16.mxu0 0
        %758 = vmatpush1.bf16.msra.mxu0 0
        %759 = vmatprep.subr.bf16.mxu0 0
        %760 = vmatpush1.bf16.msra.mxu0 0
        %761 = vmatprep.subr.bf16.mxu0 0
        %762 = vmatpush1.bf16.msra.mxu0 0
        %763 = vmatprep.subr.bf16.mxu0 0
        %764 = vmatpush1.bf16.msra.mxu0 0
        %765 = vmatprep.subr.bf16.mxu0 0
        %766 = vmatpush1.bf16.msra.mxu0 0
        %767 = vmatprep.mubr.bf16.mxu0 0
        %768 = vmatmul.mubr.bf16.gmra.mrb[0].mxu0 %v730
        %v769 = vpop.f32.mrb[0].mxu0
        %v770 = vadd.f32 0.0, %v769
        %v771 = vpop.f32.mrb[0].mxu0
        %v772 = vpop.f32.mrb[0].mxu0
        %v773 = vpop.f32.mrb[0].mxu0
        %774 = vdwg.mxu0
        %v776 = vsel %vm396, %v680, 0
        %v779 = vsel %vm685, %v394, 0
        %781 = vmatprep.subr.bf16.mxu0 0
        %782 = vmatpush1.bf16.msra.mxu0 %v779
        %783 = vmatprep.subr.bf16.mxu0 0
        %784 = vmatpush1.bf16.msra.mxu0 0
        %785 = vmatprep.subr.bf16.mxu0 0
        %786 = vmatpush1.bf16.msra.mxu0 0
        %787 = vmatprep.subr.bf16.mxu0 0
        %788 = vmatpush1.bf16.msra.mxu0 0
        %789 = vmatprep.subr.bf16.mxu0 0
        %790 = vmatpush1.bf16.msra.mxu0 0
        %791 = vmatprep.subr.bf16.mxu0 0
        %792 = vmatpush1.bf16.msra.mxu0 0
        %793 = vmatprep.subr.bf16.mxu0 0
        %794 = vmatpush1.bf16.msra.mxu0 0
        %795 = vmatprep.subr.bf16.mxu0 0
        %796 = vmatpush1.bf16.msra.mxu0 0
        %797 = vmatprep.subr.bf16.mxu0 0
        %798 = vmatpush1.bf16.msra.mxu0 0
        %799 = vmatprep.subr.bf16.mxu0 0
        %800 = vmatpush1.bf16.msra.mxu0 0
        %801 = vmatprep.subr.bf16.mxu0 0
        %802 = vmatpush1.bf16.msra.mxu0 0
        %803 = vmatprep.subr.bf16.mxu0 0
        %804 = vmatpush1.bf16.msra.mxu0 0
        %805 = vmatprep.subr.bf16.mxu0 0
        %806 = vmatpush1.bf16.msra.mxu0 0
        %807 = vmatprep.subr.bf16.mxu0 0
        %808 = vmatpush1.bf16.msra.mxu0 0
        %809 = vmatprep.subr.bf16.mxu0 0
        %810 = vmatpush1.bf16.msra.mxu0 0
        %811 = vmatprep.subr.bf16.mxu0 0
        %812 = vmatpush1.bf16.msra.mxu0 0
        %813 = vmatprep.mubr.bf16.mxu0 0
        %814 = vmatmul.mubr.bf16.gmra.mrb[0].mxu0 %v776
        %v815 = vpop.f32.mrb[0].mxu0
        %v816 = vadd.f32 0.0, %v815
        %v817 = vpop.f32.mrb[0].mxu0
        %v818 = vpop.f32.mrb[0].mxu0
        %v819 = vpop.f32.mrb[0].mxu0
        %820 = vdwg.mxu0
        %v822 = vsel %vm396, %v681, 0
        %v825 = vsel %vm685, %v395, 0
        %827 = vmatprep.subr.bf16.mxu0 0
        %828 = vmatpush1.bf16.msra.mxu0 %v825
        %829 = vmatprep.subr.bf16.mxu0 0
        %830 = vmatpush1.bf16.msra.mxu0 0
        %831 = vmatprep.subr.bf16.mxu0 0
        %832 = vmatpush1.bf16.msra.mxu0 0
        %833 = vmatprep.subr.bf16.mxu0 0
        %834 = vmatpush1.bf16.msra.mxu0 0
        %835 = vmatprep.subr.bf16.mxu0 0
        %836 = vmatpush1.bf16.msra.mxu0 0
        %837 = vmatprep.subr.bf16.mxu0 0
        %838 = vmatpush1.bf16.msra.mxu0 0
        %839 = vmatprep.subr.bf16.mxu0 0
        %840 = vmatpush1.bf16.msra.mxu0 0
        %841 = vmatprep.subr.bf16.mxu0 0
        %842 = vmatpush1.bf16.msra.mxu0 0
        %843 = vmatprep.subr.bf16.mxu0 0
        %844 = vmatpush1.bf16.msra.mxu0 0
        %845 = vmatprep.subr.bf16.mxu0 0
        %846 = vmatpush1.bf16.msra.mxu0 0
        %847 = vmatprep.subr.bf16.mxu0 0
        %848 = vmatpush1.bf16.msra.mxu0 0
        %849 = vmatprep.subr.bf16.mxu0 0
        %850 = vmatpush1.bf16.msra.mxu0 0
        %851 = vmatprep.subr.bf16.mxu0 0
        %852 = vmatpush1.bf16.msra.mxu0 0
        %853 = vmatprep.subr.bf16.mxu0 0
        %854 = vmatpush1.bf16.msra.mxu0 0
        %855 = vmatprep.subr.bf16.mxu0 0
        %856 = vmatpush1.bf16.msra.mxu0 0
        %857 = vmatprep.subr.bf16.mxu0 0
        %858 = vmatpush1.bf16.msra.mxu0 0
        %859 = vmatprep.mubr.bf16.mxu0 0
        %860 = vmatmul.mubr.bf16.gmra.mrb[0].mxu0 %v822
        %v861 = vpop.f32.mrb[0].mxu0
        %v862 = vadd.f32 0.0, %v861
        %v863 = vpop.f32.mrb[0].mxu0
        %v864 = vpop.f32.mrb[0].mxu0
        %v865 = vpop.f32.mrb[0].mxu0
        %866 = vdwg.mxu0
        %v867 = vld [vmem:[#allocation2] sm:$0xff]
        %v868 = vld [vmem:[#allocation2 + $0x8] sm:$0xff]
        %v869 = vld [vmem:[#allocation2 + $0x10] sm:$0xff]
        %v870 = vld [vmem:[#allocation2 + $0x18] sm:$0xff]
        %872 = vset.pattern.permute.xlu0 0
        %873 = vperm.xlu0 %872, %v606
        %v874 = vpop.permute.xlu0 %873
        %877 = vset.pattern.permute.xlu0 0
        %878 = vperm.xlu0 %877, %v608
        %v879 = vpop.permute.xlu0 %878
        %882 = vset.pattern.permute.xlu0 0
        %883 = vperm.xlu0 %882, %v610
        %v884 = vpop.permute.xlu0 %883
        %887 = vset.pattern.permute.xlu0 0
        %888 = vperm.xlu0 %887, %v612
        %v889 = vpop.permute.xlu0 %888
        %v891 = vmul.f32 %v874, %v867
        %v892 = vmul.f32 %v879, %v868
        %v893 = vmul.f32 %v884, %v869
        %v894 = vmul.f32 %v889, %v870
        %v895 = vadd.f32 %v891, %v724
        %v896 = vadd.f32 %v892, %v770
        %v897 = vadd.f32 %v893, %v816
        %v898 = vadd.f32 %v894, %v862
        %899 = vst.msk [vmem:[#allocation2] sm:$0xff] %vm396, %v895
        %900 = vst.msk [vmem:[#allocation2 + $0x8] sm:$0xff] %vm396, %v896
        %901 = vst.msk [vmem:[#allocation2 + $0x10] sm:$0xff] %vm396, %v897
        %902 = vst.msk [vmem:[#allocation2 + $0x18] sm:$0xff] %vm396, %v898
        // Predicated region
        $region61: #{tpu_custom_call.1} parent=39 // pred_check
          %p903 = pneg %p366
        $region62: #{tpu_custom_call.1} parent=39 // pred_check_branch
          %905 = sbr.rel (%p903) target = $region64
        $region63: #{tpu_custom_call.1} parent=39 // pred_region
          %v906 = vld [vmem:[#allocation4] sm:$0xff]
          %v907 = vld [vmem:[#allocation4 + $0x8] sm:$0xff]
          %v908 = vld [vmem:[#allocation4 + $0x10] sm:$0xff]
          %v909 = vld [vmem:[#allocation4 + $0x18] sm:$0xff]
          %v910 = vrcp.pop %v906
          %v911 = vrcp.pop %v907
          %v912 = vrcp.pop %v908
          %v913 = vrcp.pop %v909
          %v914 = vld [vmem:[#allocation2] sm:$0xff]
          %v915 = vld [vmem:[#allocation2 + $0x8] sm:$0xff]
          %v916 = vld [vmem:[#allocation2 + $0x10] sm:$0xff]
          %v917 = vld [vmem:[#allocation2 + $0x18] sm:$0xff]
          %919 = vset.pattern.permute.xlu0 0
          %920 = vperm.xlu0 %919, %v910
          %v921 = vpop.permute.xlu0 %920
          %924 = vset.pattern.permute.xlu0 0
          %925 = vperm.xlu0 %924, %v911
          %v926 = vpop.permute.xlu0 %925
          %929 = vset.pattern.permute.xlu0 0
          %930 = vperm.xlu0 %929, %v912
          %v931 = vpop.permute.xlu0 %930
          %934 = vset.pattern.permute.xlu0 0
          %935 = vperm.xlu0 %934, %v913
          %v936 = vpop.permute.xlu0 %935
          %v938 = vmul.f32 %v914, %v921
          %v939 = vmul.f32 %v915, %v926
          %v940 = vmul.f32 %v916, %v931
          %v941 = vmul.f32 %v917, %v936
          %v942 = vpack.c.bf16 %v938, %v938
          %v943 = vpack.c.bf16 %v939, %v939
          %v944 = vpack.c.bf16 %v940, %v940
          %v945 = vpack.c.bf16 %v941, %v941
          %v946 = vld [vmem:[#allocation11] sm:$0xf]
          %v947 = vld [vmem:[#allocation11 + $0x4] sm:$0xf]
          %v948 = vld [vmem:[#allocation11 + $0x8] sm:$0xf]
          %v949 = vld [vmem:[#allocation11 + $0xc] sm:$0xf]
          %v951 = vsel %vm396, %v942, 0
          %v954 = vsel %vm685, %v946, 0
          %956 = vmatprep.subr.bf16.mxu0 0
          %957 = vmatpush1.bf16.msra.mxu0 %v954
          %958 = vmatprep.subr.bf16.mxu0 0
          %959 = vmatpush1.bf16.msra.mxu0 0
          %960 = vmatprep.subr.bf16.mxu0 0
          %961 = vmatpush1.bf16.msra.mxu0 0
          %962 = vmatprep.subr.bf16.mxu0 0
          %963 = vmatpush1.bf16.msra.mxu0 0
          %964 = vmatprep.subr.bf16.mxu0 0
          %965 = vmatpush1.bf16.msra.mxu0 0
          %966 = vmatprep.subr.bf16.mxu0 0
          %967 = vmatpush1.bf16.msra.mxu0 0
          %968 = vmatprep.subr.bf16.mxu0 0
          %969 = vmatpush1.bf16.msra.mxu0 0
          %970 = vmatprep.subr.bf16.mxu0 0
          %971 = vmatpush1.bf16.msra.mxu0 0
          %972 = vmatprep.subr.bf16.mxu0 0
          %973 = vmatpush1.bf16.msra.mxu0 0
          %974 = vmatprep.subr.bf16.mxu0 0
          %975 = vmatpush1.bf16.msra.mxu0 0
          %976 = vmatprep.subr.bf16.mxu0 0
          %977 = vmatpush1.bf16.msra.mxu0 0
          %978 = vmatprep.subr.bf16.mxu0 0
          %979 = vmatpush1.bf16.msra.mxu0 0
          %980 = vmatprep.subr.bf16.mxu0 0
          %981 = vmatpush1.bf16.msra.mxu0 0
          %982 = vmatprep.subr.bf16.mxu0 0
          %983 = vmatpush1.bf16.msra.mxu0 0
          %984 = vmatprep.subr.bf16.mxu0 0
          %985 = vmatpush1.bf16.msra.mxu0 0
          %986 = vmatprep.subr.bf16.mxu0 0
          %987 = vmatpush1.bf16.msra.mxu0 0
          %988 = vmatprep.mubr.bf16.mxu0 0
          %989 = vmatmul.mubr.bf16.gmra.mrb[0].mxu0 %v951
          %v990 = vpop.f32.mrb[0].mxu0
          %v991 = vadd.f32 0.0, %v990
          %v992 = vpop.f32.mrb[0].mxu0
          %v993 = vpop.f32.mrb[0].mxu0
          %v994 = vpop.f32.mrb[0].mxu0
          %995 = vdwg.mxu0
          %v997 = vsel %vm396, %v943, 0
          %v1000 = vsel %vm685, %v947, 0
          %1002 = vmatprep.subr.bf16.mxu0 0
          %1003 = vmatpush1.bf16.msra.mxu0 %v1000
          %1004 = vmatprep.subr.bf16.mxu0 0
          %1005 = vmatpush1.bf16.msra.mxu0 0
          %1006 = vmatprep.subr.bf16.mxu0 0
          %1007 = vmatpush1.bf16.msra.mxu0 0
          %1008 = vmatprep.subr.bf16.mxu0 0
          %1009 = vmatpush1.bf16.msra.mxu0 0
          %1010 = vmatprep.subr.bf16.mxu0 0
          %1011 = vmatpush1.bf16.msra.mxu0 0
          %1012 = vmatprep.subr.bf16.mxu0 0
          %1013 = vmatpush1.bf16.msra.mxu0 0
          %1014 = vmatprep.subr.bf16.mxu0 0
          %1015 = vmatpush1.bf16.msra.mxu0 0
          %1016 = vmatprep.subr.bf16.mxu0 0
          %1017 = vmatpush1.bf16.msra.mxu0 0
          %1018 = vmatprep.subr.bf16.mxu0 0
          %1019 = vmatpush1.bf16.msra.mxu0 0
          %1020 = vmatprep.subr.bf16.mxu0 0
          %1021 = vmatpush1.bf16.msra.mxu0 0
          %1022 = vmatprep.subr.bf16.mxu0 0
          %1023 = vmatpush1.bf16.msra.mxu0 0
          %1024 = vmatprep.subr.bf16.mxu0 0
          %1025 = vmatpush1.bf16.msra.mxu0 0
          %1026 = vmatprep.subr.bf16.mxu0 0
          %1027 = vmatpush1.bf16.msra.mxu0 0
          %1028 = vmatprep.subr.bf16.mxu0 0
          %1029 = vmatpush1.bf16.msra.mxu0 0
          %1030 = vmatprep.subr.bf16.mxu0 0
          %1031 = vmatpush1.bf16.msra.mxu0 0
          %1032 = vmatprep.subr.bf16.mxu0 0
          %1033 = vmatpush1.bf16.msra.mxu0 0
          %1034 = vmatprep.mubr.bf16.mxu0 0
          %1035 = vmatmul.mubr.bf16.gmra.mrb[0].mxu0 %v997
          %v1036 = vpop.f32.mrb[0].mxu0
          %v1037 = vadd.f32 0.0, %v1036
          %v1038 = vpop.f32.mrb[0].mxu0
          %v1039 = vpop.f32.mrb[0].mxu0
          %v1040 = vpop.f32.mrb[0].mxu0
          %1041 = vdwg.mxu0
          %v1043 = vsel %vm396, %v944, 0
          %v1046 = vsel %vm685, %v948, 0
          %1048 = vmatprep.subr.bf16.mxu0 0
          %1049 = vmatpush1.bf16.msra.mxu0 %v1046
          %1050 = vmatprep.subr.bf16.mxu0 0
          %1051 = vmatpush1.bf16.msra.mxu0 0
          %1052 = vmatprep.subr.bf16.mxu0 0
          %1053 = vmatpush1.bf16.msra.mxu0 0
          %1054 = vmatprep.subr.bf16.mxu0 0
          %1055 = vmatpush1.bf16.msra.mxu0 0
          %1056 = vmatprep.subr.bf16.mxu0 0
          %1057 = vmatpush1.bf16.msra.mxu0 0
          %1058 = vmatprep.subr.bf16.mxu0 0
          %1059 = vmatpush1.bf16.msra.mxu0 0
          %1060 = vmatprep.subr.bf16.mxu0 0
          %1061 = vmatpush1.bf16.msra.mxu0 0
          %1062 = vmatprep.subr.bf16.mxu0 0
          %1063 = vmatpush1.bf16.msra.mxu0 0
          %1064 = vmatprep.subr.bf16.mxu0 0
          %1065 = vmatpush1.bf16.msra.mxu0 0
          %1066 = vmatprep.subr.bf16.mxu0 0
          %1067 = vmatpush1.bf16.msra.mxu0 0
          %1068 = vmatprep.subr.bf16.mxu0 0
          %1069 = vmatpush1.bf16.msra.mxu0 0
          %1070 = vmatprep.subr.bf16.mxu0 0
          %1071 = vmatpush1.bf16.msra.mxu0 0
          %1072 = vmatprep.subr.bf16.mxu0 0
          %1073 = vmatpush1.bf16.msra.mxu0 0
          %1074 = vmatprep.subr.bf16.mxu0 0
          %1075 = vmatpush1.bf16.msra.mxu0 0
          %1076 = vmatprep.subr.bf16.mxu0 0
          %1077 = vmatpush1.bf16.msra.mxu0 0
          %1078 = vmatprep.subr.bf16.mxu0 0
          %1079 = vmatpush1.bf16.msra.mxu0 0
          %1080 = vmatprep.mubr.bf16.mxu0 0
          %1081 = vmatmul.mubr.bf16.gmra.mrb[0].mxu0 %v1043
          %v1082 = vpop.f32.mrb[0].mxu0
          %v1083 = vadd.f32 0.0, %v1082
          %v1084 = vpop.f32.mrb[0].mxu0
          %v1085 = vpop.f32.mrb[0].mxu0
          %v1086 = vpop.f32.mrb[0].mxu0
          %1087 = vdwg.mxu0
          %v1089 = vsel %vm396, %v945, 0
          %v1092 = vsel %vm685, %v949, 0
          %1094 = vmatprep.subr.bf16.mxu0 0
          %1095 = vmatpush1.bf16.msra.mxu0 %v1092
          %1096 = vmatprep.subr.bf16.mxu0 0
          %1097 = vmatpush1.bf16.msra.mxu0 0
          %1098 = vmatprep.subr.bf16.mxu0 0
          %1099 = vmatpush1.bf16.msra.mxu0 0
          %1100 = vmatprep.subr.bf16.mxu0 0
          %1101 = vmatpush1.bf16.msra.mxu0 0
          %1102 = vmatprep.subr.bf16.mxu0 0
          %1103 = vmatpush1.bf16.msra.mxu0 0
          %1104 = vmatprep.subr.bf16.mxu0 0
          %1105 = vmatpush1.bf16.msra.mxu0 0
          %1106 = vmatprep.subr.bf16.mxu0 0
          %1107 = vmatpush1.bf16.msra.mxu0 0
          %1108 = vmatprep.subr.bf16.mxu0 0
          %1109 = vmatpush1.bf16.msra.mxu0 0
          %1110 = vmatprep.subr.bf16.mxu0 0
          %1111 = vmatpush1.bf16.msra.mxu0 0
          %1112 = vmatprep.subr.bf16.mxu0 0
          %1113 = vmatpush1.bf16.msra.mxu0 0
          %1114 = vmatprep.subr.bf16.mxu0 0
          %1115 = vmatpush1.bf16.msra.mxu0 0
          %1116 = vmatprep.subr.bf16.mxu0 0
          %1117 = vmatpush1.bf16.msra.mxu0 0
          %1118 = vmatprep.subr.bf16.mxu0 0
          %1119 = vmatpush1.bf16.msra.mxu0 0
          %1120 = vmatprep.subr.bf16.mxu0 0
          %1121 = vmatpush1.bf16.msra.mxu0 0
          %1122 = vmatprep.subr.bf16.mxu0 0
          %1123 = vmatpush1.bf16.msra.mxu0 0
          %1124 = vmatprep.subr.bf16.mxu0 0
          %1125 = vmatpush1.bf16.msra.mxu0 0
          %1126 = vmatprep.mubr.bf16.mxu0 0
          %1127 = vmatmul.mubr.bf16.gmra.mrb[0].mxu0 %v1089
          %v1128 = vpop.f32.mrb[0].mxu0
          %v1129 = vadd.f32 0.0, %v1128
          %v1130 = vpop.f32.mrb[0].mxu0
          %v1131 = vpop.f32.mrb[0].mxu0
          %v1132 = vpop.f32.mrb[0].mxu0
          %1133 = vdwg.mxu0
          %vm1134 = vcmask 261120
          %v1135 = vsel %vm1134, %v991, 0.0
          %v1136 = vsel %vm1134, %v1037, 0.0
          %v1137 = vadd.f32 %v1135, %v1136
          %v1138 = vsel %vm1134, %v1083, 0.0
          %v1139 = vadd.f32 %v1137, %v1138
          %v1140 = vsel %vm1134, %v1129, 0.0
          %v1141 = vadd.f32 %v1139, %v1140
          %v1142 = vld [vmem:[%s4] sm:$0x1]
          %v1144 = vlaneseq
          %v1145 = vshrl.u32 %v1144, 7
          %v1146 = vsub.s32 0, %v1145
          %v1147 = vrot.slane %v1142, %v1146
          %v1149 = vadd.f32 %v1141, %v1147
          %1150 = vst.msk [vmem:[%s364] sm:$0xff] %vm1134, %v1149
        $region64: #{tpu_custom_call.1} parent=39 // pred_fallthru
          _
        %s1151 = sand.u32 %s181, 1
        %s1152 = scalar_lea.sflag [#allocation7], %s1151
        %s1153 = sand.u32 %s181, 1
        %s1154 = smul.addr %s1153, 8
        %s1155 = scalar_lea.vmem [#allocation13], %s1154
        // Predicated region
        $region65: #{tpu_custom_call.1} parent=39 // pred_check
          %p1156 = pneg %p191
        $region66: #{tpu_custom_call.1} parent=39 // pred_check_branch
          %1158 = sbr.rel (%p1156) target = $region68
        $region67: #{tpu_custom_call.1} parent=39 // pred_region
          %s1160 = ssub.s32 128, 128
          %1161 = vsyncadd %s1152, %s1160
          %s1162 = sadd.s32 %s32, %s31
          %s1163 = smul.addr %s1162, 128
          %s1164 = scalar_lea.hbm %s5, %s1163
          %s1166 = sshll.u32 %s1155, 4
          %s1167 = int_to_ptr.vmem [resolvable:$true] %s1166
          %1169 = dma.vmem_to_hbm [thread:$0]  %s1167, 128, %s1164, %s1152
        $region68: #{tpu_custom_call.1} parent=39 // pred_fallthru
          _
      $region40: #{tpu_custom_call.1} parent=5 // pred_fallthru
        _
      %p1170 = scmp.le.s32.totalorder 2, %s21
      // Predicated region
      $region69: #{tpu_custom_call.1} parent=5 // pred_check
        %p1171 = pneg %p1170
      $region70: #{tpu_custom_call.1} parent=5 // pred_check_branch
        %1173 = sbr.rel (%p1171) target = $region72
      $region71: #{tpu_custom_call.1} parent=5 // pred_region
        %s1174 = ssub.s32 %s21, 2
        // Predicated region
        $region73: #{tpu_custom_call.1} parent=71 // pred_check
          %p1175 = pneg %p197
        $region74: #{tpu_custom_call.1} parent=71 // pred_check_branch
          %1177 = sbr.rel (%p1175) target = $region76
        $region75: #{tpu_custom_call.1} parent=71 // pred_region
          %s1178 = sand.u32 %s182, 1
          %s1179 = scalar_lea.sflag [#allocation7], %s1178
          %s1180 = sand.u32 %s182, 1
          %s1181 = smul.addr %s1180, 8
          %s1182 = scalar_lea.vmem [#allocation13], %s1181
          %1183 = dma.done %s1179, 128
        $region76: #{tpu_custom_call.1} parent=71 // pred_fallthru
          _
      $region72: #{tpu_custom_call.1} parent=5 // pred_fallthru
        _
    $region6: #{tpu_custom_call.1} parent=1 // loop_footer
      %s25 = sadd.s32 1, %s21
    $region7: #{tpu_custom_call.1} parent=1 // loop_footer_branch
      %20 = sbr.rel target = $region3
    $region8: #{tpu_custom_call.1} parent=1 // loop_exit
      _
    %1184 = vsyncpa [#allocation6], 1
    %s1185 = scalar_lea.sflag [#allocation6], 1
    %1186 = vsyncpa %s1185, 1
    %1187 = vsyncpa [#allocation9], 1
    %s1188 = scalar_lea.sflag [#allocation9], 1
    %1189 = vsyncpa %s1188, 1
    %1190 = vsyncpa [#allocation12], 1
    %1191 = vsyncpa [#allocation7], 1
    %s1192 = scalar_lea.sflag [#allocation7], 1
    %1193 = vsyncpa %s1192, 1

</llo_original>
